<compile_context>
chip_gen: v5e
topology: v5e:2x2
jax: 0.10.0
libtpu: 0.0.40
codegen_flags: <defaults>
</compile_context>

<pallas_src>
import math

import numpy as np
import jax
import jax.numpy as jnp
from jax.experimental import pallas as pl
from jax.experimental.pallas import tpu as pltpu

EPS = 1e-6
BN_EPS = 1e-5
LEAKY_SLOPE = 0.01          # torch.nn.LeakyReLU default negative_slope

# ---- small, module-consistent config ------------------------------------
NUM_STATE_VAR = 4
NUM_ACTION_VAR = 1
FC_DIM0 = 32                # fc_dims[0]
BS = 8                      # batch size (BatchNorm1d training needs bs > 1)
CODE_DIM = 16               # ours_params.code_dim
CODEBOOK_SIZE = 8           # ours_params.codebook_size
ENC_HIDDEN = 64             # vq_encode_fc_dims = [64]
DEC_HIDDEN = 64             # vq_decode_fc_dims = [64]
LOCAL_MASK_SAMPLING_NUM = 2 # ours_params.local_mask_sampling_num
TAU = 1.0                   # hard sample is tau-invariant for tau > 0

TOTAL_VAR = NUM_STATE_VAR + NUM_ACTION_VAR      # 5
INPUT_DIM = TOTAL_VAR * FC_DIM0                 # 160
LCM1 = NUM_STATE_VAR                            # 4
LCM2 = TOTAL_VAR - 1                            # 4 (learn_action=True)
OUTPUT_DIM = LCM1 * LCM2                        # 16
LA_DIM = NUM_STATE_VAR * TOTAL_VAR              # 20 (flattened log_alpha width)
LANES = 128                                     # lane-dense width
NOUT = LOCAL_MASK_SAMPLING_NUM + 3              # sample[2], prob, z_e, z_q

# row-param slab row indices
R_GE1, R_BE1, R_BEF, R_CBSQ, R_GD1, R_BD1, R_BIAS_EFF = 0, 1, 2, 3, 4, 5, 6
# weight slab indices
W_EF, W_CBT, W_CB, W_D1, W_DF = 0, 1, 2, 3, 4


# ---------------------------------------------------------------------------
# Single fused kernel.  Everything is lane-dense (x, 128); padding columns /
# rows of every weight are exact zeros so padded lanes stay exactly zero
# through BN (gamma/beta pad = 0) and every matmul.
# ---------------------------------------------------------------------------
def _vqvae_fused_kernel(x_ref, noise_ref, we1_ref, w_ref, rp_ref, out_ref):
    rp = rp_ref[...]                                            # (8, 128)

    # ---- encoder fc_0 (no bias): one (BS,160)x(160,128) MXU pass
    h = jnp.dot(x_ref[...], we1_ref[...], preferred_element_type=jnp.float32)

    # BatchNorm1d (training-mode biased batch stats) + LeakyReLU
    mu = jnp.mean(h, axis=0, keepdims=True)
    var = jnp.mean((h - mu) ** 2, axis=0, keepdims=True)
    h = (h - mu) * jax.lax.rsqrt(var + BN_EPS) * rp[R_GE1:R_GE1 + 1] \
        + rp[R_BE1:R_BE1 + 1]
    h = jnp.where(h > 0, h, LEAKY_SLOPE * h)

    # encoder fc_final -> z_e (lanes >= CODE_DIM are exactly 0)
    z_e = jnp.dot(h, w_ref[W_EF], preferred_element_type=jnp.float32) \
        + rp[R_BEF:R_BEF + 1]
    out_ref[LOCAL_MASK_SAMPLING_NUM + 1, :, :] = z_e

    # ---- VQ nearest-embed.  argmin_k ||z - c_k||^2 == argmin_k (||c_k||^2 - 2 z.c_k)
    # (per-row ||z||^2 shift dropped).  cbsq pad lanes hold +1e30 -> never win.
    zc = jnp.dot(z_e, w_ref[W_CBT], preferred_element_type=jnp.float32)   # (bs,128)
    d = rp[R_CBSQ:R_CBSQ + 1] - 2.0 * zc
    dmin = jnp.min(d, axis=1, keepdims=True)
    col = jax.lax.broadcasted_iota(jnp.int32, d.shape, 1)
    first_idx = jnp.min(jnp.where(d <= dmin, col, LANES), axis=1, keepdims=True)
    onehot = (col == first_idx).astype(jnp.float32)            # first-min tie-break
    z_q = jnp.dot(onehot, w_ref[W_CB], preferred_element_type=jnp.float32)
    out_ref[LOCAL_MASK_SAMPLING_NUM + 2, :, :] = z_q           # == emb (ST fwd value)

    # ---- decoder: fc_0 (no bias) + BN + LeakyReLU
    h2 = jnp.dot(z_q, w_ref[W_D1], preferred_element_type=jnp.float32)
    mu2 = jnp.mean(h2, axis=0, keepdims=True)
    var2 = jnp.mean((h2 - mu2) ** 2, axis=0, keepdims=True)
    h2 = (h2 - mu2) * jax.lax.rsqrt(var2 + BN_EPS) * rp[R_GD1:R_GD1 + 1] \
        + rp[R_BD1:R_BD1 + 1]
    h2 = jnp.where(h2 > 0, h2, LEAKY_SLOPE * h2)

    # decoder fc_final with adjust_dimension (learn_upper/learn_action) folded
    # into the weights host-side: log_alpha = h2 @ (wdf@perm) + (bdf@perm + 100*diag)
    log_alpha = jnp.dot(h2, w_ref[W_DF], preferred_element_type=jnp.float32) \
        + rp[R_BIAS_EFF:R_BIAS_EFF + 1]                        # (bs, 128)

    # prob = sigmoid(log_alpha)  (pad lanes hold 0.5, sliced away in wrapper)
    out_ref[LOCAL_MASK_SAMPLING_NUM, :, :] = 1.0 / (1.0 + jnp.exp(-log_alpha))

    # ---- hard gumbel-sigmoid samples, vectorized over the sampling axis.
    # (la + noise) > 0  <=>  sigmoid((la + noise)/tau) > 0.5  for any tau > 0.
    out_ref[0:LOCAL_MASK_SAMPLING_NUM, :, :] = (
        (log_alpha[None, :, :] + noise_ref[...]) > 0.0).astype(jnp.float32)


# ---------------------------------------------------------------------------
# Wrapper: preprocess + logistic noise, single pallas_call, slice the packed slab.
# ---------------------------------------------------------------------------
def vqvae_forward(feature, action, params, key):
    # preprocess_ours_mask: cat along var axis -> (bs, var, D) -> (bs, var*D)
    x = jnp.concatenate([feature, action], axis=0)
    x = jnp.transpose(x, (1, 0, 2)).reshape(BS, INPUT_DIM)

    # sample_logistic (generated with jax.random; pltpu PRNG has no
    # interpret-mode lowering).  Pass a fresh key per forward step.
    u = jax.random.uniform(key, (LOCAL_MASK_SAMPLING_NUM, BS, LANES), jnp.float32)
    u = jnp.clip(u, EPS, 1.0 - EPS)
    noise = jnp.log(u) - jnp.log(1.0 - u)

    vmem = pl.BlockSpec(memory_space=pltpu.MemorySpace.VMEM)
    # TODO(synk): on v7x a leading "parallel" grid axis over batch tiles would
    # engage the second TensorCore; at this micro batch a grid is pure overhead.
    out = pl.pallas_call(
        _vqvae_fused_kernel,
        out_shape=jax.ShapeDtypeStruct((NOUT, BS, LANES), jnp.float32),
        in_specs=[vmem] * 5,
        out_specs=vmem,
    )(x, noise, params["we1"], params["wslab"], params["rowparams"])

    sample = out[:LOCAL_MASK_SAMPLING_NUM, :, :LA_DIM].reshape(
        LOCAL_MASK_SAMPLING_NUM, BS, NUM_STATE_VAR, TOTAL_VAR)
    prob = out[LOCAL_MASK_SAMPLING_NUM, :, :LA_DIM].reshape(
        BS, NUM_STATE_VAR, TOTAL_VAR)
    z_e = out[LOCAL_MASK_SAMPLING_NUM + 1, :, :CODE_DIM]
    z_q = out[LOCAL_MASK_SAMPLING_NUM + 2, :, :CODE_DIM]
    # z_e / z_q correspond to (z_e, emb) used by loss_function; forward returns (sample, prob)
    return sample, prob, z_e, z_q


def init_params(key):
    ks = jax.random.split(key, 8)

    def kaiming_like(k, fan_in, shape):
        bound = 1.0 / math.sqrt(fan_in)
        return jax.random.uniform(k, shape, jnp.float32, -bound, bound)

    # raw parameters (stored transposed, i.e. in x @ W layout)
    we1 = kaiming_like(ks[0], INPUT_DIM, (INPUT_DIM, ENC_HIDDEN))
    wef = kaiming_like(ks[1], ENC_HIDDEN, (ENC_HIDDEN, CODE_DIM))
    bef = kaiming_like(ks[2], ENC_HIDDEN, (CODE_DIM,))
    codebook = jax.random.normal(ks[3], (CODEBOOK_SIZE, CODE_DIM), jnp.float32)
    wd1 = kaiming_like(ks[4], CODE_DIM, (CODE_DIM, DEC_HIDDEN))
    wdf = kaiming_like(ks[5], DEC_HIDDEN, (DEC_HIDDEN, OUTPUT_DIM))
    bdf = kaiming_like(ks[6], DEC_HIDDEN, (OUTPUT_DIM,))
    ge1 = jnp.ones((ENC_HIDDEN,), jnp.float32)
    be1 = jnp.zeros((ENC_HIDDEN,), jnp.float32)
    gd1 = jnp.ones((DEC_HIDDEN,), jnp.float32)
    bd1 = jnp.zeros((DEC_HIDDEN,), jnp.float32)

    # ---- fold adjust_dimension (learn_upper=True, learn_action=True):
    #      log_alpha[b, r, k] = 100 if k==r ; z[b, r*4 + k - (k>r)] otherwise
    perm = np.zeros((OUTPUT_DIM, LANES), np.float32)
    diag = np.zeros((LANES,), np.float32)
    for r in range(NUM_STATE_VAR):
        for k in range(TOTAL_VAR):
            lane = r * TOTAL_VAR + k
            if k == r:
                diag[lane] = 1.0
            else:
                perm[r * LCM2 + (k if k < r else k - 1), lane] = 1.0
    perm = jnp.asarray(perm)
    diag = jnp.asarray(diag)
    wdf_eff = wdf @ perm                            # (DEC_HIDDEN, 128)
    bias_eff = bdf @ perm + 100.0 * diag            # (128,)

    # ---- pack into lane-dense slabs (zero padding keeps the math exact)
    def pad2(a, rows, cols):
        return jnp.pad(a, ((0, rows - a.shape[0]), (0, cols - a.shape[1])))

    def row(v):
        return jnp.pad(v, (0, LANES - v.shape[0]))

    wslab = jnp.stack([
        pad2(wef, LANES, LANES),          # W_EF : encoder fc_final
        pad2(codebook.T, LANES, LANES),   # W_CBT: codebook^T  (z_e @ cbT)
        pad2(codebook, LANES, LANES),     # W_CB : codebook    (onehot @ cb)
        pad2(wd1, LANES, LANES),          # W_D1 : decoder fc_0
        pad2(wdf_eff, LANES, LANES),      # W_DF : decoder fc_final ∘ adjust_dim
    ])
    cbsq = jnp.sum(codebook * codebook, axis=1)     # (K,)
    cbsq_row = jnp.full((LANES,), 1e30, jnp.float32).at[:CODEBOOK_SIZE].set(cbsq)
    rowparams = jnp.stack([
        row(ge1), row(be1), row(bef), cbsq_row,
        row(gd1), row(bd1), row(bias_eff),
        jnp.zeros((LANES,), jnp.float32),
    ])

    return {
        "we1": pad2(we1, INPUT_DIM, LANES),   # (160, 128)
        "wslab": wslab,                       # (5, 128, 128)
        "rowparams": rowparams,               # (8, 128)
        "_codebook": codebook,                # host-side only, for validation
    }


if __name__ == "__main__":
    key = jax.random.PRNGKey(0)
    k_param, k_feat, k_act, k_noise = jax.random.split(key, 4)

    params = init_params(k_param)
    feature = jax.random.normal(k_feat, (NUM_STATE_VAR, BS, FC_DIM0), jnp.float32)
    action = jax.random.normal(k_act, (NUM_ACTION_VAR, BS, FC_DIM0), jnp.float32)

    fwd = jax.jit(vqvae_forward)
    sample, prob, z_e, z_q = fwd(feature, action, params, k_noise)
    jax.block_until_ready((sample, prob, z_e, z_q))

    assert sample.shape == (LOCAL_MASK_SAMPLING_NUM, BS, NUM_STATE_VAR, TOTAL_VAR)
    assert prob.shape == (BS, NUM_STATE_VAR, TOTAL_VAR)
    assert z_e.shape == (BS, CODE_DIM) and z_q.shape == (BS, CODE_DIM)
    # hard samples are exactly 0/1; diagonal log_alpha == 100 -> prob ~ 1, sample == 1
    assert bool(jnp.all((sample == 0.0) | (sample == 1.0)))
    diag_idx = jnp.arange(NUM_STATE_VAR)
    assert bool(jnp.all(prob[:, diag_idx, diag_idx] > 0.99))
    assert bool(jnp.all(sample[:, :, diag_idx, diag_idx] == 1.0))
    assert bool(jnp.all(prob >= 0.0)) and bool(jnp.all(prob <= 1.0))
    assert bool(jnp.all(jnp.isfinite(z_e))) and bool(jnp.all(jnp.isfinite(prob)))
    # every z_q row must be a codebook row (nearest-embed output)
    cb = params["_codebook"]
    d_zq = jnp.min(jnp.sum((z_q[:, None, :] - cb[None, :, :]) ** 2, axis=-1), axis=-1)
    assert bool(jnp.all(d_zq < 1e-5))
    # TODO(synk): loss bookkeeping (reg/vq/commit lists, code_index), BN running-stat
    # and EMA codebook updates are stateful Python-side training logic, not kernel work.
    print("KERNEL_OK")
</pallas_src>

<mosaic_0001>
module attributes {stable_mosaic.version = 11 : i64} {
  func.func @_vqvae_fused_kernel(%arg0: memref<8x160xf32, #tpu.memory_space<vmem>>, %arg1: memref<2x8x128xf32, #tpu.memory_space<vmem>>, %arg2: memref<160x128xf32, #tpu.memory_space<vmem>>, %arg3: memref<5x128x128xf32, #tpu.memory_space<vmem>>, %arg4: memref<8x128xf32, #tpu.memory_space<vmem>>, %arg5: memref<5x8x128xf32, #tpu.memory_space<vmem>>) attributes {dimension_semantics = [], scalar_prefetch = 0 : i64, scratch_operands = 0 : i64, tpu.core_type = #tpu.core_type<tc>} {
    %c0 = arith.constant 0 : index
    %c0_0 = arith.constant 0 : index
    %0 = vector.load %arg4[%c0, %c0_0] : memref<8x128xf32, #tpu.memory_space<vmem>>, vector<8x128xf32>
    %c0_1 = arith.constant 0 : index
    %c0_2 = arith.constant 0 : index
    %1 = vector.load %arg0[%c0_1, %c0_2] : memref<8x160xf32, #tpu.memory_space<vmem>>, vector<8x160xf32>
    %c0_3 = arith.constant 0 : index
    %c0_4 = arith.constant 0 : index
    %2 = vector.load %arg2[%c0_3, %c0_4] : memref<160x128xf32, #tpu.memory_space<vmem>>, vector<160x128xf32>
    %cst = arith.constant dense<0.000000e+00> : vector<8x128xf32>
    %3 = tpu.matmul %1, %2, %cst {dimension_numbers = #tpu.dot_dimension_numbers<[1], [0], [0], [1], [0, 0, 1, 1], [], []>} : vector<8x160xf32>, vector<160x128xf32>, vector<8x128xf32> -> vector<8x128xf32>
    %cst_5 = arith.constant dense<0.000000e+00> : vector<128xf32>
    %4 = vector.multi_reduction <add>, %3, %cst_5 [0] : vector<8x128xf32> to vector<128xf32>
    %5 = vector.shape_cast %4 : vector<128xf32> to vector<1x128xf32>
    %cst_6 = arith.constant 8.000000e+00 : f32
    %6 = vector.broadcast %cst_6 : f32 to vector<1x128xf32>
    %7 = arith.divf %5, %6 : vector<1x128xf32>
    %8 = vector.broadcast %7 : vector<1x128xf32> to vector<8x128xf32>
    %9 = arith.subf %3, %8 : vector<8x128xf32>
    %10 = arith.mulf %9, %9 : vector<8x128xf32>
    %cst_7 = arith.constant dense<0.000000e+00> : vector<128xf32>
    %11 = vector.multi_reduction <add>, %10, %cst_7 [0] : vector<8x128xf32> to vector<128xf32>
    %12 = vector.shape_cast %11 : vector<128xf32> to vector<1x128xf32>
    %cst_8 = arith.constant 8.000000e+00 : f32
    %13 = vector.broadcast %cst_8 : f32 to vector<1x128xf32>
    %14 = arith.divf %12, %13 : vector<1x128xf32>
    %15 = vector.broadcast %7 : vector<1x128xf32> to vector<8x128xf32>
    %16 = arith.subf %3, %15 : vector<8x128xf32>
    %cst_9 = arith.constant 9.99999974E-6 : f32
    %17 = vector.broadcast %cst_9 : f32 to vector<1x128xf32>
    %18 = arith.addf %14, %17 : vector<1x128xf32>
    %19 = math.rsqrt %18 : vector<1x128xf32>
    %20 = vector.broadcast %19 : vector<1x128xf32> to vector<8x128xf32>
    %21 = arith.mulf %16, %20 : vector<8x128xf32>
    %22 = vector.extract_strided_slice %0 {offsets = [0, 0], sizes = [1, 128], strides = [1, 1]} : vector<8x128xf32> to vector<1x128xf32>
    %23 = vector.broadcast %22 : vector<1x128xf32> to vector<8x128xf32>
    %24 = arith.mulf %21, %23 : vector<8x128xf32>
    %25 = vector.extract_strided_slice %0 {offsets = [1, 0], sizes = [1, 128], strides = [1, 1]} : vector<8x128xf32> to vector<1x128xf32>
    %26 = vector.broadcast %25 : vector<1x128xf32> to vector<8x128xf32>
    %27 = arith.addf %24, %26 : vector<8x128xf32>
    %cst_10 = arith.constant 0.000000e+00 : f32
    %28 = vector.broadcast %cst_10 : f32 to vector<8x128xf32>
    %29 = arith.cmpf ogt, %27, %28 : vector<8x128xf32>
    %cst_11 = arith.constant 0.00999999977 : f32
    %30 = vector.broadcast %cst_11 : f32 to vector<8x128xf32>
    %31 = arith.mulf %30, %27 : vector<8x128xf32>
    %32 = arith.select %29, %27, %31 : vector<8x128xi1>, vector<8x128xf32>
    %c0_12 = arith.constant 0 : index
    %c0_13 = arith.constant 0 : index
    %c0_14 = arith.constant 0 : index
    %33 = vector.load %arg3[%c0_12, %c0_13, %c0_14] : memref<5x128x128xf32, #tpu.memory_space<vmem>>, vector<1x128x128xf32>
    %34 = vector.shape_cast %33 : vector<1x128x128xf32> to vector<128x128xf32>
    %cst_15 = arith.constant dense<0.000000e+00> : vector<8x128xf32>
    %35 = tpu.matmul %32, %34, %cst_15 {dimension_numbers = #tpu.dot_dimension_numbers<[1], [0], [0], [1], [0, 0, 1, 1], [], []>} : vector<8x128xf32>, vector<128x128xf32>, vector<8x128xf32> -> vector<8x128xf32>
    %36 = vector.extract_strided_slice %0 {offsets = [2, 0], sizes = [1, 128], strides = [1, 1]} : vector<8x128xf32> to vector<1x128xf32>
    %37 = vector.broadcast %36 : vector<1x128xf32> to vector<8x128xf32>
    %38 = arith.addf %35, %37 : vector<8x128xf32>
    %c3 = arith.constant 3 : index
    %c0_16 = arith.constant 0 : index
    %c0_17 = arith.constant 0 : index
    %39 = vector.load %arg5[%c3, %c0_16, %c0_17] : memref<5x8x128xf32, #tpu.memory_space<vmem>>, vector<1x8x128xf32>
    %40 = vector.shape_cast %39 : vector<1x8x128xf32> to vector<8x128xf32>
    %41 = vector.shape_cast %38 : vector<8x128xf32> to vector<1x8x128xf32>
    tpu.vector_store %arg5[%c3, %c0_16, %c0_17], %41 {strides = array<i32>} : memref<5x8x128xf32, #tpu.memory_space<vmem>>, vector<1x8x128xf32>,
    %c1 = arith.constant 1 : index
    %c0_18 = arith.constant 0 : index
    %c0_19 = arith.constant 0 : index
    %42 = vector.load %arg3[%c1, %c0_18, %c0_19] : memref<5x128x128xf32, #tpu.memory_space<vmem>>, vector<1x128x128xf32>
    %43 = vector.shape_cast %42 : vector<1x128x128xf32> to vector<128x128xf32>
    %cst_20 = arith.constant dense<0.000000e+00> : vector<8x128xf32>
    %44 = tpu.matmul %38, %43, %cst_20 {dimension_numbers = #tpu.dot_dimension_numbers<[1], [0], [0], [1], [0, 0, 1, 1], [], []>} : vector<8x128xf32>, vector<128x128xf32>, vector<8x128xf32> -> vector<8x128xf32>
    %45 = vector.extract_strided_slice %0 {offsets = [3, 0], sizes = [1, 128], strides = [1, 1]} : vector<8x128xf32> to vector<1x128xf32>
    %cst_21 = arith.constant 2.000000e+00 : f32
    %46 = vector.broadcast %cst_21 : f32 to vector<8x128xf32>
    %47 = arith.mulf %46, %44 : vector<8x128xf32>
    %48 = vector.broadcast %45 : vector<1x128xf32> to vector<8x128xf32>
    %49 = arith.subf %48, %47 : vector<8x128xf32>
    %cst_22 = arith.constant dense<0x7F800000> : vector<8xf32>
    %50 = vector.multi_reduction <minimumf>, %49, %cst_22 [1] : vector<8x128xf32> to vector<8xf32>
    %51 = vector.shape_cast %50 : vector<8xf32> to vector<8x1xf32>
    %52 = tpu.iota {dimensions = array<i32: 1>} : vector<8x128xi32>
    %53 = vector.broadcast %51 : vector<8x1xf32> to vector<8x128xf32>
    %54 = arith.cmpf ole, %49, %53 : vector<8x128xf32>
    %c128_i32 = arith.constant 128 : i32
    %55 = vector.broadcast %c128_i32 : i32 to vector<8x128xi32>
    %56 = arith.select %54, %52, %55 : vector<8x128xi1>, vector<8x128xi32>
    %cst_23 = arith.constant dense<2147483647> : vector<8xi32>
    %57 = vector.multi_reduction <minsi>, %56, %cst_23 [1] : vector<8x128xi32> to vector<8xi32>
    %58 = vector.shape_cast %57 : vector<8xi32> to vector<8x1xi32>
    %59 = vector.broadcast %58 : vector<8x1xi32> to vector<8x128xi32>
    %60 = arith.cmpi eq, %52, %59 : vector<8x128xi32>
    %61 = arith.extui %60 : vector<8x128xi1> to vector<8x128xi32>
    %62 = arith.sitofp %61 : vector<8x128xi32> to vector<8x128xf32>
    %c2 = arith.constant 2 : index
    %c0_24 = arith.constant 0 : index
    %c0_25 = arith.constant 0 : index
    %63 = vector.load %arg3[%c2, %c0_24, %c0_25] : memref<5x128x128xf32, #tpu.memory_space<vmem>>, vector<1x128x128xf32>
    %64 = vector.shape_cast %63 : vector<1x128x128xf32> to vector<128x128xf32>
    %cst_26 = arith.constant dense<0.000000e+00> : vector<8x128xf32>
    %65 = tpu.matmul %62, %64, %cst_26 {dimension_numbers = #tpu.dot_dimension_numbers<[1], [0], [0], [1], [0, 0, 1, 1], [], []>} : vector<8x128xf32>, vector<128x128xf32>, vector<8x128xf32> -> vector<8x128xf32>
    %c4 = arith.constant 4 : index
    %c0_27 = arith.constant 0 : index
    %c0_28 = arith.constant 0 : index
    %66 = vector.load %arg5[%c4, %c0_27, %c0_28] : memref<5x8x128xf32, #tpu.memory_space<vmem>>, vector<1x8x128xf32>
    %67 = vector.shape_cast %66 : vector<1x8x128xf32> to vector<8x128xf32>
    %68 = vector.shape_cast %65 : vector<8x128xf32> to vector<1x8x128xf32>
    tpu.vector_store %arg5[%c4, %c0_27, %c0_28], %68 {strides = array<i32>} : memref<5x8x128xf32, #tpu.memory_space<vmem>>, vector<1x8x128xf32>,
    %c3_29 = arith.constant 3 : index
    %c0_30 = arith.constant 0 : index
    %c0_31 = arith.constant 0 : index
    %69 = vector.load %arg3[%c3_29, %c0_30, %c0_31] : memref<5x128x128xf32, #tpu.memory_space<vmem>>, vector<1x128x128xf32>
    %70 = vector.shape_cast %69 : vector<1x128x128xf32> to vector<128x128xf32>
    %cst_32 = arith.constant dense<0.000000e+00> : vector<8x128xf32>
    %71 = tpu.matmul %65, %70, %cst_32 {dimension_numbers = #tpu.dot_dimension_numbers<[1], [0], [0], [1], [0, 0, 1, 1], [], []>} : vector<8x128xf32>, vector<128x128xf32>, vector<8x128xf32> -> vector<8x128xf32>
    %cst_33 = arith.constant dense<0.000000e+00> : vector<128xf32>
    %72 = vector.multi_reduction <add>, %71, %cst_33 [0] : vector<8x128xf32> to vector<128xf32>
    %73 = vector.shape_cast %72 : vector<128xf32> to vector<1x128xf32>
    %cst_34 = arith.constant 8.000000e+00 : f32
    %74 = vector.broadcast %cst_34 : f32 to vector<1x128xf32>
    %75 = arith.divf %73, %74 : vector<1x128xf32>
    %76 = vector.broadcast %75 : vector<1x128xf32> to vector<8x128xf32>
    %77 = arith.subf %71, %76 : vector<8x128xf32>
    %78 = arith.mulf %77, %77 : vector<8x128xf32>
    %cst_35 = arith.constant dense<0.000000e+00> : vector<128xf32>
    %79 = vector.multi_reduction <add>, %78, %cst_35 [0] : vector<8x128xf32> to vector<128xf32>
    %80 = vector.shape_cast %79 : vector<128xf32> to vector<1x128xf32>
    %cst_36 = arith.constant 8.000000e+00 : f32
    %81 = vector.broadcast %cst_36 : f32 to vector<1x128xf32>
    %82 = arith.divf %80, %81 : vector<1x128xf32>
    %83 = vector.broadcast %75 : vector<1x128xf32> to vector<8x128xf32>
    %84 = arith.subf %71, %83 : vector<8x128xf32>
    %cst_37 = arith.constant 9.99999974E-6 : f32
    %85 = vector.broadcast %cst_37 : f32 to vector<1x128xf32>
    %86 = arith.addf %82, %85 : vector<1x128xf32>
    %87 = math.rsqrt %86 : vector<1x128xf32>
    %88 = vector.broadcast %87 : vector<1x128xf32> to vector<8x128xf32>
    %89 = arith.mulf %84, %88 : vector<8x128xf32>
    %90 = vector.extract_strided_slice %0 {offsets = [4, 0], sizes = [1, 128], strides = [1, 1]} : vector<8x128xf32> to vector<1x128xf32>
    %91 = vector.broadcast %90 : vector<1x128xf32> to vector<8x128xf32>
    %92 = arith.mulf %89, %91 : vector<8x128xf32>
    %93 = vector.extract_strided_slice %0 {offsets = [5, 0], sizes = [1, 128], strides = [1, 1]} : vector<8x128xf32> to vector<1x128xf32>
    %94 = vector.broadcast %93 : vector<1x128xf32> to vector<8x128xf32>
    %95 = arith.addf %92, %94 : vector<8x128xf32>
    %cst_38 = arith.constant 0.000000e+00 : f32
    %96 = vector.broadcast %cst_38 : f32 to vector<8x128xf32>
    %97 = arith.cmpf ogt, %95, %96 : vector<8x128xf32>
    %cst_39 = arith.constant 0.00999999977 : f32
    %98 = vector.broadcast %cst_39 : f32 to vector<8x128xf32>
    %99 = arith.mulf %98, %95 : vector<8x128xf32>
    %100 = arith.select %97, %95, %99 : vector<8x128xi1>, vector<8x128xf32>
    %c4_40 = arith.constant 4 : index
    %c0_41 = arith.constant 0 : index
    %c0_42 = arith.constant 0 : index
    %101 = vector.load %arg3[%c4_40, %c0_41, %c0_42] : memref<5x128x128xf32, #tpu.memory_space<vmem>>, vector<1x128x128xf32>
    %102 = vector.shape_cast %101 : vector<1x128x128xf32> to vector<128x128xf32>
    %cst_43 = arith.constant dense<0.000000e+00> : vector<8x128xf32>
    %103 = tpu.matmul %100, %102, %cst_43 {dimension_numbers = #tpu.dot_dimension_numbers<[1], [0], [0], [1], [0, 0, 1, 1], [], []>} : vector<8x128xf32>, vector<128x128xf32>, vector<8x128xf32> -> vector<8x128xf32>
    %104 = vector.extract_strided_slice %0 {offsets = [6, 0], sizes = [1, 128], strides = [1, 1]} : vector<8x128xf32> to vector<1x128xf32>
    %105 = vector.broadcast %104 : vector<1x128xf32> to vector<8x128xf32>
    %106 = arith.addf %103, %105 : vector<8x128xf32>
    %cst_44 = arith.constant 0.000000e+00 : f32
    %107 = vector.broadcast %cst_44 : f32 to vector<8x128xf32>
    %108 = arith.subf %107, %106 : vector<8x128xf32>
    %109 = math.exp %108 : vector<8x128xf32>
    %cst_45 = arith.constant 1.000000e+00 : f32
    %110 = vector.broadcast %cst_45 : f32 to vector<8x128xf32>
    %111 = arith.addf %110, %109 : vector<8x128xf32>
    %cst_46 = arith.constant 1.000000e+00 : f32
    %112 = vector.broadcast %cst_46 : f32 to vector<8x128xf32>
    %113 = arith.divf %112, %111 : vector<8x128xf32>
    %c2_47 = arith.constant 2 : index
    %c0_48 = arith.constant 0 : index
    %c0_49 = arith.constant 0 : index
    %114 = vector.load %arg5[%c2_47, %c0_48, %c0_49] : memref<5x8x128xf32, #tpu.memory_space<vmem>>, vector<1x8x128xf32>
    %115 = vector.shape_cast %114 : vector<1x8x128xf32> to vector<8x128xf32>
    %116 = vector.shape_cast %113 : vector<8x128xf32> to vector<1x8x128xf32>
    tpu.vector_store %arg5[%c2_47, %c0_48, %c0_49], %116 {strides = array<i32>} : memref<5x8x128xf32, #tpu.memory_space<vmem>>, vector<1x8x128xf32>,
    %117 = vector.shape_cast %106 : vector<8x128xf32> to vector<1x8x128xf32>
    %c0_50 = arith.constant 0 : index
    %c0_51 = arith.constant 0 : index
    %c0_52 = arith.constant 0 : index
    %118 = vector.load %arg1[%c0_50, %c0_51, %c0_52] : memref<2x8x128xf32, #tpu.memory_space<vmem>>, vector<2x8x128xf32>
    %119 = vector.broadcast %117 : vector<1x8x128xf32> to vector<2x8x128xf32>
    %120 = arith.addf %119, %118 : vector<2x8x128xf32>
    %cst_53 = arith.constant 0.000000e+00 : f32
    %121 = vector.broadcast %cst_53 : f32 to vector<2x8x128xf32>
    %122 = arith.cmpf ogt, %120, %121 : vector<2x8x128xf32>
    %123 = arith.extui %122 : vector<2x8x128xi1> to vector<2x8x128xi32>
    %124 = arith.sitofp %123 : vector<2x8x128xi32> to vector<2x8x128xf32>
    %c0_54 = arith.constant 0 : index
    %c0_55 = arith.constant 0 : index
    %c0_56 = arith.constant 0 : index
    %125 = vector.load %arg5[%c0_54, %c0_55, %c0_56] : memref<5x8x128xf32, #tpu.memory_space<vmem>>, vector<2x8x128xf32>
    tpu.vector_store %arg5[%c0_54, %c0_55, %c0_56], %124 {strides = array<i32>} : memref<5x8x128xf32, #tpu.memory_space<vmem>>, vector<2x8x128xf32>,
    return
  }
}

</mosaic_0001>

<llo_original>
// kernel: squeeze.7
$region0: #{squeeze.7}
  %s0 = inlined_call_operand.vmem [shape: f32[1,8,20], index: 0, kind: input, shape index: {}]
  %s1 = inlined_call_operand.vmem [shape: f32[8,4,5], index: 1, kind: output, shape index: {}]
  $region1: #{squeeze.7} parent=0
    #allocation0 [shape = 'u8[32768]{0}', space=vmem, size = 0x8000, scoped, tag = 'scoped mem for output reshape']
    %v2 = vld [vmem:[%s0] sm:$0xff]
    %vm3 = vcmask 39936
    %4 = vst.msk [vmem:[#allocation0] ss:$8 sm:$0xf] %vm3, %v2
    %5 = vst.msk [vmem:[#allocation0] ss:$8 sm:$0xf0] %vm3, %v2
    %v6 = vld [vmem:[%s0] sm:$0xff]
    %7 = vrot.lane.b32.xlu0 %v6, 123
    %v8 = vpop.permute.xlu0 %7
    %vm9 = vcmask 39936
    %s10 = scalar_lea.vmem [#allocation0], 1
    %11 = vst.msk [vmem:[%s10] ss:$8 sm:$0xf] %vm9, %v8
    %s12 = scalar_lea.vmem [#allocation0], 1
    %13 = vst.msk [vmem:[%s12] ss:$8 sm:$0xf0] %vm9, %v8
    %v14 = vld [vmem:[%s0] sm:$0xff]
    %15 = vrot.lane.b32.xlu0 %v14, 118
    %v16 = vpop.permute.xlu0 %15
    %vm17 = vcmask 39936
    %s18 = scalar_lea.vmem [#allocation0], 2
    %19 = vst.msk [vmem:[%s18] ss:$8 sm:$0xf] %vm17, %v16
    %s20 = scalar_lea.vmem [#allocation0], 2
    %21 = vst.msk [vmem:[%s20] ss:$8 sm:$0xf0] %vm17, %v16
    %v22 = vld [vmem:[%s0] sm:$0xff]
    %23 = vrot.lane.b32.xlu0 %v22, 113
    %v24 = vpop.permute.xlu0 %23
    %vm25 = vcmask 39936
    %s26 = scalar_lea.vmem [#allocation0], 3
    %27 = vst.msk [vmem:[%s26] ss:$8 sm:$0xf] %vm25, %v24
    %s28 = scalar_lea.vmem [#allocation0], 3
    %29 = vst.msk [vmem:[%s28] ss:$8 sm:$0xf0] %vm25, %v24
    %s31 = ssub.s32 16, 1
    %v32 = vld [vmem:[#allocation0] sm:%s31]
    %s34 = ssub.s32 16, 1
    %35 = vst [vmem:[%s1] sm:%s34] %v32
    %s36 = scalar_lea.vmem [#allocation0], 8
    %v37 = vld [vmem:[%s36] sm:%s31]
    %s39 = ssub.s32 16, 1
    %s40 = scalar_lea.vmem %s1, 4
    %41 = vst [vmem:[%s40] sm:%s39] %v37
    %s42 = scalar_lea.vmem [#allocation0], 16
    %v43 = vld [vmem:[%s42] sm:%s31]
    %s45 = ssub.s32 16, 1
    %s46 = scalar_lea.vmem %s1, 8
    %47 = vst [vmem:[%s46] sm:%s45] %v43
    %s48 = scalar_lea.vmem [#allocation0], 24
    %v49 = vld [vmem:[%s48] sm:%s31]
    %s51 = ssub.s32 16, 1
    %s52 = scalar_lea.vmem %s1, 12
    %53 = vst [vmem:[%s52] sm:%s51] %v49
    %s54 = scalar_lea.vmem [#allocation0], 32
    %v55 = vld [vmem:[%s54] sm:%s31]
    %s57 = ssub.s32 16, 1
    %s58 = scalar_lea.vmem %s1, 16
    %59 = vst [vmem:[%s58] sm:%s57] %v55
    %s60 = scalar_lea.vmem [#allocation0], 40
    %v61 = vld [vmem:[%s60] sm:%s31]
    %s63 = ssub.s32 16, 1
    %s64 = scalar_lea.vmem %s1, 20
    %65 = vst [vmem:[%s64] sm:%s63] %v61
    %s66 = scalar_lea.vmem [#allocation0], 48
    %v67 = vld [vmem:[%s66] sm:%s31]
    %s69 = ssub.s32 16, 1
    %s70 = scalar_lea.vmem %s1, 24
    %71 = vst [vmem:[%s70] sm:%s69] %v67
    %s72 = scalar_lea.vmem [#allocation0], 56
    %v73 = vld [vmem:[%s72] sm:%s31]
    %s75 = ssub.s32 16, 1
    %s76 = scalar_lea.vmem %s1, 28
    %77 = vst [vmem:[%s76] sm:%s75] %v73

// kernel: vqvae_forward.1
$region0: #{vqvae_forward.1}
  #allocation0 [shape = 'u32[]', space=smem, size = 0x4, offset = 0x4, fixed_abs, tag = 'smem constant byte address 0x4 - core index']
  #allocation1 [shape = 'u32[72,128]{1,0:T(1,128)}', space=vmem, size = 0x9000, scoped, tag = 'internal scratch']
  %s0 = inlined_call_operand.vmem [shape: f32[8,160], index: 0, kind: input, shape index: {}]
  %s1 = inlined_call_operand.vmem [shape: f32[2,8,128], index: 1, kind: input, shape index: {}]
  %s2 = inlined_call_operand.vmem [shape: f32[160,128], index: 2, kind: input, shape index: {}]
  %s3 = inlined_call_operand.hbm [shape: f32[5,128,128], index: 3, kind: input, shape index: {}]
  %s4 = inlined_call_operand.vmem [shape: f32[8,128], index: 4, kind: input, shape index: {}]
  %s5 = inlined_call_operand.vmem [shape: f32[5,8,128], index: 5, kind: output, shape index: {}]
  %s6 = sld [smem:[#allocation0]]
  $region34: #{vqvae_forward.1} parent=0
    _
  %s8 = ssub.s32 1, %s6
  %s9 = scalar_select 0, %s8, %s6
  $region1: #{vqvae_forward.1} parent=0
    #allocation2 [shape = 'u8[327680]{0}', space=vmem, size = 0x50000, scoped, tag = 'input window, operand 3, single buffered']
    #allocation3 [shape = 's32[1]{0}', space=sflag, size = 0x4, scoped, tag = 'scoped memory for vqvae_forward.1']
    %10 = vsyncpa [#allocation3], 0
    // Predicated region
    $region2: #{vqvae_forward.1} parent=1 // pred_check
      _
    $region3: #{vqvae_forward.1} parent=1 // pred_check_branch
      %12 = sbr.rel (0) target = $region5
    $region4: #{vqvae_forward.1} parent=1 // pred_region
      _
    $region5: #{vqvae_forward.1} parent=1 // pred_fallthru
      _
    // Predicated region
    $region6: #{vqvae_forward.1} parent=1 // pred_check
      _
    $region7: #{vqvae_forward.1} parent=1 // pred_check_branch
      %14 = sbr.rel (0) target = $region9
    $region8: #{vqvae_forward.1} parent=1 // pred_region
      _
    $region9: #{vqvae_forward.1} parent=1 // pred_fallthru
      _
    // Predicated region
    $region10: #{vqvae_forward.1} parent=1 // pred_check
      _
    $region11: #{vqvae_forward.1} parent=1 // pred_check_branch
      %16 = sbr.rel (0) target = $region13
    $region12: #{vqvae_forward.1} parent=1 // pred_region
      _
    $region13: #{vqvae_forward.1} parent=1 // pred_fallthru
      _
    // Predicated region
    $region14: #{vqvae_forward.1} parent=1 // pred_check
      _
    $region15: #{vqvae_forward.1} parent=1 // pred_check_branch
      %18 = sbr.rel (0) target = $region17
    $region16: #{vqvae_forward.1} parent=1 // pred_region
      %20 = vsyncadd [#allocation3], 0
      %s21 = sshll.u32 %s3, 4
      %s22 = int_to_ptr.hbm [resolvable:$true] %s21
      %s23 = sshll.u32 [#allocation2], 4
      %s24 = int_to_ptr.vmem [resolvable:$true] %s23
      %29 = dma.hbm_to_vmem [thread:$0]  %s22, 10240, %s24, [#allocation3], 128, 128, 8
    $region17: #{vqvae_forward.1} parent=1 // pred_fallthru
      _
    // Predicated region
    $region18: #{vqvae_forward.1} parent=1 // pred_check
      _
    $region19: #{vqvae_forward.1} parent=1 // pred_check_branch
      %31 = sbr.rel (0) target = $region21
    $region20: #{vqvae_forward.1} parent=1 // pred_region
      _
    $region21: #{vqvae_forward.1} parent=1 // pred_fallthru
      _
    // Predicated region
    $region22: #{vqvae_forward.1} parent=1 // pred_check
      _
    $region23: #{vqvae_forward.1} parent=1 // pred_check_branch
      %33 = sbr.rel (0) target = $region25
    $region24: #{vqvae_forward.1} parent=1 // pred_region
      %35 = dma.done [#allocation3], 10240
    $region25: #{vqvae_forward.1} parent=1 // pred_fallthru
      _
    %v36 = vld [vmem:[%s4] sm:$0xff]
    %v37 = vld [vmem:[%s0] sm:$0xff]
    %v38 = vld [vmem:[%s0 + $0x8] sm:$0xff]
    %v39 = vld [vmem:[%s2] sm:$0xff]
    %v40 = vld [vmem:[%s2 + $0x8] sm:$0xff]
    %v41 = vld [vmem:[%s2 + $0x10] sm:$0xff]
    %v42 = vld [vmem:[%s2 + $0x18] sm:$0xff]
    %v43 = vld [vmem:[%s2 + $0x20] sm:$0xff]
    %v44 = vld [vmem:[%s2 + $0x28] sm:$0xff]
    %v45 = vld [vmem:[%s2 + $0x30] sm:$0xff]
    %v46 = vld [vmem:[%s2 + $0x38] sm:$0xff]
    %v47 = vld [vmem:[%s2 + $0x40] sm:$0xff]
    %v48 = vld [vmem:[%s2 + $0x48] sm:$0xff]
    %v49 = vld [vmem:[%s2 + $0x50] sm:$0xff]
    %v50 = vld [vmem:[%s2 + $0x58] sm:$0xff]
    %v51 = vld [vmem:[%s2 + $0x60] sm:$0xff]
    %v52 = vld [vmem:[%s2 + $0x68] sm:$0xff]
    %v53 = vld [vmem:[%s2 + $0x70] sm:$0xff]
    %v54 = vld [vmem:[%s2 + $0x78] sm:$0xff]
    %v55 = vld [vmem:[%s2 + $0x80] sm:$0xff]
    %v56 = vld [vmem:[%s2 + $0x88] sm:$0xff]
    %v57 = vld [vmem:[%s2 + $0x90] sm:$0xff]
    %v58 = vld [vmem:[%s2 + $0x98] sm:$0xff]
    %vm59 = vcmask 261120
    %v61 = vsel %vm59, %v38, 0
    %63 = vmatpush.msra.mxu0 %v54
    %64 = vmatpush.msra.mxu0 %v53
    %65 = vmatpush.msra.mxu0 %v52
    %66 = vmatpush.msra.mxu0 %v51
    %67 = vmatpush.msra.mxu0 %v50
    %68 = vmatpush.msra.mxu0 %v49
    %69 = vmatpush.msra.mxu0 %v48
    %70 = vmatpush.msra.mxu0 %v47
    %71 = vmatpush.msra.mxu0 %v46
    %72 = vmatpush.msra.mxu0 %v45
    %73 = vmatpush.msra.mxu0 %v44
    %74 = vmatpush.msra.mxu0 %v43
    %75 = vmatpush.msra.mxu0 %v42
    %76 = vmatpush.msra.mxu0 %v41
    %77 = vmatpush.msra.mxu0 %v40
    %78 = vmatpush.msra.mxu0 %v39
    %79 = vmatmul.f32.gmra.mxu0 %v37
    %v80 = vpop.f32.mrf.mxu0
    %v81 = vadd.f32 0.0, %v80
    %82 = vdwg.mxu0
    %83 = vmatpush.msra.mxu0 0.0
    %84 = vmatpush.msra.mxu0 0.0
    %85 = vmatpush.msra.mxu0 0.0
    %86 = vmatpush.msra.mxu0 0.0
    %87 = vmatpush.msra.mxu0 0.0
    %88 = vmatpush.msra.mxu0 0.0
    %89 = vmatpush.msra.mxu0 0.0
    %90 = vmatpush.msra.mxu0 0.0
    %91 = vmatpush.msra.mxu0 0.0
    %92 = vmatpush.msra.mxu0 0.0
    %93 = vmatpush.msra.mxu0 0.0
    %94 = vmatpush.msra.mxu0 0.0
    %95 = vmatpush.msra.mxu0 %v58
    %96 = vmatpush.msra.mxu0 %v57
    %97 = vmatpush.msra.mxu0 %v56
    %98 = vmatpush.msra.mxu0 %v55
    %99 = vmatmul.f32.gmra.mxu0 %v61
    %v100 = vpop.f32.mrf.mxu0
    %v101 = vadd.f32 %v81, %v100
    %102 = vdwg.mxu0
    %v103 = vrot.slane %v101, 4
    %v104 = vadd.f32 %v101, %v103
    %v105 = vrot.slane %v104, 2
    %v106 = vadd.f32 %v104, %v105
    %v107 = vrot.slane %v106, 1
    %v108 = vadd.f32 %v106, %v107
    %v109 = vrcp.pop 8.0
    %v110 = vmul.f32 8.0, %v109
    %v111 = vsub.f32 1.0, %v110
    %v112 = vmul.f32 %v109, %v111
    %v113 = vadd.f32 %v109, %v112
    %vm114 = vweird.f32 %v109
    %v115 = vsel %vm114, %v109, %v113
    %v116 = vmul.f32 %v108, %v115
    %v117 = vsub.f32 %v101, %v116
    %v118 = vmul.f32 %v117, %v117
    %v119 = vrot.slane %v118, 4
    %v120 = vadd.f32 %v118, %v119
    %v121 = vrot.slane %v120, 2
    %v122 = vadd.f32 %v120, %v121
    %v123 = vrot.slane %v122, 1
    %v124 = vadd.f32 %v122, %v123
    %v125 = vmul.f32 %v124, %v115
    %v126 = vadd.f32 %v125, 1e-05
    %v127 = vrsqrt.pop %v126
    %v128 = vmul.f32 %v127, %v126
    %v129 = vmul.f32 %v128, %v127
    %v130 = vmul.f32 0.5, %v129
    %v131 = vsub.f32 1.5, %v130
    %v132 = vmul.f32 %v127, %v131
    %vm133 = vweird.f32 %v126
    %vm134 = vweird.f32 %v127
    %vm135 = vmor %vm133, %vm134
    %v136 = vsel %vm135, %v127, %v132
    %v137 = vmul.f32 %v117, %v136
    %v138 = vperm.slane %v36, 0
    %v139 = vmul.f32 %v137, %v138
    %v140 = vperm.slane %v36, 1
    %v141 = vadd.f32 %v139, %v140
    %vm142 = vcmp.gt.f32.partialorder %v141, 0.0
    %v143 = vmul.f32 %v141, 0.01
    %v144 = vsel %vm142, %v141, %v143
    %v145 = vld [vmem:[#allocation2] sm:$0xff]
    %v146 = vld [vmem:[#allocation2 + $0x8] sm:$0xff]
    %v147 = vld [vmem:[#allocation2 + $0x10] sm:$0xff]
    %v148 = vld [vmem:[#allocation2 + $0x18] sm:$0xff]
    %v149 = vld [vmem:[#allocation2 + $0x20] sm:$0xff]
    %v150 = vld [vmem:[#allocation2 + $0x28] sm:$0xff]
    %v151 = vld [vmem:[#allocation2 + $0x30] sm:$0xff]
    %v152 = vld [vmem:[#allocation2 + $0x38] sm:$0xff]
    %v153 = vld [vmem:[#allocation2 + $0x40] sm:$0xff]
    %v154 = vld [vmem:[#allocation2 + $0x48] sm:$0xff]
    %v155 = vld [vmem:[#allocation2 + $0x50] sm:$0xff]
    %v156 = vld [vmem:[#allocation2 + $0x58] sm:$0xff]
    %v157 = vld [vmem:[#allocation2 + $0x60] sm:$0xff]
    %v158 = vld [vmem:[#allocation2 + $0x68] sm:$0xff]
    %v159 = vld [vmem:[#allocation2 + $0x70] sm:$0xff]
    %v160 = vld [vmem:[#allocation2 + $0x78] sm:$0xff]
    %v161 = vperm.slane %v36, 2
    %162 = vmatpush.msra.mxu0 %v160
    %163 = vmatpush.msra.mxu0 %v159
    %164 = vmatpush.msra.mxu0 %v158
    %165 = vmatpush.msra.mxu0 %v157
    %166 = vmatpush.msra.mxu0 %v156
    %167 = vmatpush.msra.mxu0 %v155
    %168 = vmatpush.msra.mxu0 %v154
    %169 = vmatpush.msra.mxu0 %v153
    %170 = vmatpush.msra.mxu0 %v152
    %171 = vmatpush.msra.mxu0 %v151
    %172 = vmatpush.msra.mxu0 %v150
    %173 = vmatpush.msra.mxu0 %v149
    %174 = vmatpush.msra.mxu0 %v148
    %175 = vmatpush.msra.mxu0 %v147
    %176 = vmatpush.msra.mxu0 %v146
    %177 = vmatpush.msra.mxu0 %v145
    %178 = vmatmul.f32.gmra.mxu0 %v144
    %v179 = vpop.f32.mrf.mxu0
    %v180 = vadd.f32 %v161, %v179
    %181 = vdwg.mxu0
    %s182 = scalar_lea.vmem %s5, 24
    %183 = vst [vmem:[%s182] sm:$0xff] %v180
    %s184 = scalar_lea.vmem [#allocation2], 128
    %v185 = vld [vmem:[%s184] sm:$0xff]
    %v186 = vld [vmem:[%s184 + $0x8] sm:$0xff]
    %v187 = vld [vmem:[%s184 + $0x10] sm:$0xff]
    %v188 = vld [vmem:[%s184 + $0x18] sm:$0xff]
    %v189 = vld [vmem:[%s184 + $0x20] sm:$0xff]
    %v190 = vld [vmem:[%s184 + $0x28] sm:$0xff]
    %v191 = vld [vmem:[%s184 + $0x30] sm:$0xff]
    %v192 = vld [vmem:[%s184 + $0x38] sm:$0xff]
    %v193 = vld [vmem:[%s184 + $0x40] sm:$0xff]
    %v194 = vld [vmem:[%s184 + $0x48] sm:$0xff]
    %v195 = vld [vmem:[%s184 + $0x50] sm:$0xff]
    %v196 = vld [vmem:[%s184 + $0x58] sm:$0xff]
    %v197 = vld [vmem:[%s184 + $0x60] sm:$0xff]
    %v198 = vld [vmem:[%s184 + $0x68] sm:$0xff]
    %v199 = vld [vmem:[%s184 + $0x70] sm:$0xff]
    %v200 = vld [vmem:[%s184 + $0x78] sm:$0xff]
    %201 = vmatpush.msra.mxu0 %v200
    %202 = vmatpush.msra.mxu0 %v199
    %203 = vmatpush.msra.mxu0 %v198
    %204 = vmatpush.msra.mxu0 %v197
    %205 = vmatpush.msra.mxu0 %v196
    %206 = vmatpush.msra.mxu0 %v195
    %207 = vmatpush.msra.mxu0 %v194
    %208 = vmatpush.msra.mxu0 %v193
    %209 = vmatpush.msra.mxu0 %v192
    %210 = vmatpush.msra.mxu0 %v191
    %211 = vmatpush.msra.mxu0 %v190
    %212 = vmatpush.msra.mxu0 %v189
    %213 = vmatpush.msra.mxu0 %v188
    %214 = vmatpush.msra.mxu0 %v187
    %215 = vmatpush.msra.mxu0 %v186
    %216 = vmatpush.msra.mxu0 %v185
    %217 = vmatmul.f32.gmra.mxu0 %v180
    %v218 = vpop.f32.mrf.mxu0
    %v219 = vadd.f32 0.0, %v218
    %220 = vdwg.mxu0
    %v221 = vmul.f32 %v219, 2.0
    %v222 = vperm.slane %v36, 3
    %v223 = vsub.f32 %v222, %v221
    %224 = vmin.xlane.f32.xlu0 %v223
    %v225 = vpop.xlane.xlu0 %224
    %v226 = vlaneseq
    %v227 = vand.u32 %v226, 127
    %vm228 = vcmp.le.f32.partialorder %v223, %v225
    %v229 = vsel %vm228, %v227, 128
    %v230 = vand.u32 %v229, 65535
    %v231 = vshra.s32 %v229, 16
    %v232 = vcvt.s32.f32 %v230
    %v233 = vcvt.s32.f32 %v231
    %234 = vmin.xlane.f32.xlu0 %v233
    %v235 = vpop.xlane.xlu0 %234
    %vm236 = vcmp.eq.f32.partialorder %v233, %v235
    %v237 = vsel %vm236, %v232, inf
    %238 = vmin.xlane.f32.xlu0 %v237
    %v239 = vpop.xlane.xlu0 %238
    %v240 = vcvt.f32.s32 %v239
    %v241 = vcvt.f32.s32 %v235
    %v242 = vshll.u32 %v241, 16
    %v243 = vadd.s32 %v242, %v240
    %vm244 = vcmp.eq.s32.totalorder %v227, %v243
    %v245 = vsel %vm244, 1, 0
    %v246 = vcvt.s32.f32 %v245
    %s247 = scalar_lea.vmem [#allocation2], 256
    %v248 = vld [vmem:[%s247] sm:$0xff]
    %v249 = vld [vmem:[%s247 + $0x8] sm:$0xff]
    %v250 = vld [vmem:[%s247 + $0x10] sm:$0xff]
    %v251 = vld [vmem:[%s247 + $0x18] sm:$0xff]
    %v252 = vld [vmem:[%s247 + $0x20] sm:$0xff]
    %v253 = vld [vmem:[%s247 + $0x28] sm:$0xff]
    %v254 = vld [vmem:[%s247 + $0x30] sm:$0xff]
    %v255 = vld [vmem:[%s247 + $0x38] sm:$0xff]
    %v256 = vld [vmem:[%s247 + $0x40] sm:$0xff]
    %v257 = vld [vmem:[%s247 + $0x48] sm:$0xff]
    %v258 = vld [vmem:[%s247 + $0x50] sm:$0xff]
    %v259 = vld [vmem:[%s247 + $0x58] sm:$0xff]
    %v260 = vld [vmem:[%s247 + $0x60] sm:$0xff]
    %v261 = vld [vmem:[%s247 + $0x68] sm:$0xff]
    %v262 = vld [vmem:[%s247 + $0x70] sm:$0xff]
    %v263 = vld [vmem:[%s247 + $0x78] sm:$0xff]
    %264 = vmatpush.msra.mxu0 %v263
    %265 = vmatpush.msra.mxu0 %v262
    %266 = vmatpush.msra.mxu0 %v261
    %267 = vmatpush.msra.mxu0 %v260
    %268 = vmatpush.msra.mxu0 %v259
    %269 = vmatpush.msra.mxu0 %v258
    %270 = vmatpush.msra.mxu0 %v257
    %271 = vmatpush.msra.mxu0 %v256
    %272 = vmatpush.msra.mxu0 %v255
    %273 = vmatpush.msra.mxu0 %v254
    %274 = vmatpush.msra.mxu0 %v253
    %275 = vmatpush.msra.mxu0 %v252
    %276 = vmatpush.msra.mxu0 %v251
    %277 = vmatpush.msra.mxu0 %v250
    %278 = vmatpush.msra.mxu0 %v249
    %279 = vmatpush.msra.mxu0 %v248
    %280 = vmatmul.f32.gmra.mxu0 %v246
    %v281 = vpop.f32.mrf.mxu0
    %v282 = vadd.f32 0.0, %v281
    %283 = vdwg.mxu0
    %s284 = scalar_lea.vmem %s5, 32
    %285 = vst [vmem:[%s284] sm:$0xff] %v282
    %s286 = scalar_lea.vmem [#allocation2], 384
    %v287 = vld [vmem:[%s286] sm:$0xff]
    %v288 = vld [vmem:[%s286 + $0x8] sm:$0xff]
    %v289 = vld [vmem:[%s286 + $0x10] sm:$0xff]
    %v290 = vld [vmem:[%s286 + $0x18] sm:$0xff]
    %v291 = vld [vmem:[%s286 + $0x20] sm:$0xff]
    %v292 = vld [vmem:[%s286 + $0x28] sm:$0xff]
    %v293 = vld [vmem:[%s286 + $0x30] sm:$0xff]
    %v294 = vld [vmem:[%s286 + $0x38] sm:$0xff]
    %v295 = vld [vmem:[%s286 + $0x40] sm:$0xff]
    %v296 = vld [vmem:[%s286 + $0x48] sm:$0xff]
    %v297 = vld [vmem:[%s286 + $0x50] sm:$0xff]
    %v298 = vld [vmem:[%s286 + $0x58] sm:$0xff]
    %v299 = vld [vmem:[%s286 + $0x60] sm:$0xff]
    %v300 = vld [vmem:[%s286 + $0x68] sm:$0xff]
    %v301 = vld [vmem:[%s286 + $0x70] sm:$0xff]
    %v302 = vld [vmem:[%s286 + $0x78] sm:$0xff]
    %303 = vmatpush.msra.mxu0 %v302
    %304 = vmatpush.msra.mxu0 %v301
    %305 = vmatpush.msra.mxu0 %v300
    %306 = vmatpush.msra.mxu0 %v299
    %307 = vmatpush.msra.mxu0 %v298
    %308 = vmatpush.msra.mxu0 %v297
    %309 = vmatpush.msra.mxu0 %v296
    %310 = vmatpush.msra.mxu0 %v295
    %311 = vmatpush.msra.mxu0 %v294
    %312 = vmatpush.msra.mxu0 %v293
    %313 = vmatpush.msra.mxu0 %v292
    %314 = vmatpush.msra.mxu0 %v291
    %315 = vmatpush.msra.mxu0 %v290
    %316 = vmatpush.msra.mxu0 %v289
    %317 = vmatpush.msra.mxu0 %v288
    %318 = vmatpush.msra.mxu0 %v287
    %319 = vmatmul.f32.gmra.mxu0 %v282
    %v320 = vpop.f32.mrf.mxu0
    %v321 = vadd.f32 0.0, %v320
    %322 = vdwg.mxu0
    %v323 = vrot.slane %v321, 4
    %v324 = vadd.f32 %v321, %v323
    %v325 = vrot.slane %v324, 2
    %v326 = vadd.f32 %v324, %v325
    %v327 = vrot.slane %v326, 1
    %v328 = vadd.f32 %v326, %v327
    %v329 = vmul.f32 %v328, %v115
    %v330 = vsub.f32 %v321, %v329
    %v331 = vmul.f32 %v330, %v330
    %v332 = vrot.slane %v331, 4
    %v333 = vadd.f32 %v331, %v332
    %v334 = vrot.slane %v333, 2
    %v335 = vadd.f32 %v333, %v334
    %v336 = vrot.slane %v335, 1
    %v337 = vadd.f32 %v335, %v336
    %v338 = vmul.f32 %v337, %v115
    %v339 = vadd.f32 %v338, 1e-05
    %v340 = vrsqrt.pop %v339
    %v341 = vmul.f32 %v340, %v339
    %v342 = vmul.f32 %v341, %v340
    %v343 = vmul.f32 0.5, %v342
    %v344 = vsub.f32 1.5, %v343
    %v345 = vmul.f32 %v340, %v344
    %vm346 = vweird.f32 %v339
    %vm347 = vweird.f32 %v340
    %vm348 = vmor %vm346, %vm347
    %v349 = vsel %vm348, %v340, %v345
    %v350 = vmul.f32 %v330, %v349
    %v351 = vperm.slane %v36, 4
    %v352 = vmul.f32 %v350, %v351
    %v353 = vperm.slane %v36, 5
    %v354 = vadd.f32 %v352, %v353
    %vm355 = vcmp.gt.f32.partialorder %v354, 0.0
    %v356 = vmul.f32 %v354, 0.01
    %v357 = vsel %vm355, %v354, %v356
    %s358 = scalar_lea.vmem [#allocation2], 512
    %v359 = vld [vmem:[%s358] sm:$0xff]
    %v360 = vld [vmem:[%s358 + $0x8] sm:$0xff]
    %v361 = vld [vmem:[%s358 + $0x10] sm:$0xff]
    %v362 = vld [vmem:[%s358 + $0x18] sm:$0xff]
    %v363 = vld [vmem:[%s358 + $0x20] sm:$0xff]
    %v364 = vld [vmem:[%s358 + $0x28] sm:$0xff]
    %v365 = vld [vmem:[%s358 + $0x30] sm:$0xff]
    %v366 = vld [vmem:[%s358 + $0x38] sm:$0xff]
    %v367 = vld [vmem:[%s358 + $0x40] sm:$0xff]
    %v368 = vld [vmem:[%s358 + $0x48] sm:$0xff]
    %v369 = vld [vmem:[%s358 + $0x50] sm:$0xff]
    %v370 = vld [vmem:[%s358 + $0x58] sm:$0xff]
    %v371 = vld [vmem:[%s358 + $0x60] sm:$0xff]
    %v372 = vld [vmem:[%s358 + $0x68] sm:$0xff]
    %v373 = vld [vmem:[%s358 + $0x70] sm:$0xff]
    %v374 = vld [vmem:[%s358 + $0x78] sm:$0xff]
    %v375 = vperm.slane %v36, 6
    %376 = vmatpush.msra.mxu0 %v374
    %377 = vmatpush.msra.mxu0 %v373
    %378 = vmatpush.msra.mxu0 %v372
    %379 = vmatpush.msra.mxu0 %v371
    %380 = vmatpush.msra.mxu0 %v370
    %381 = vmatpush.msra.mxu0 %v369
    %382 = vmatpush.msra.mxu0 %v368
    %383 = vmatpush.msra.mxu0 %v367
    %384 = vmatpush.msra.mxu0 %v366
    %385 = vmatpush.msra.mxu0 %v365
    %386 = vmatpush.msra.mxu0 %v364
    %387 = vmatpush.msra.mxu0 %v363
    %388 = vmatpush.msra.mxu0 %v362
    %389 = vmatpush.msra.mxu0 %v361
    %390 = vmatpush.msra.mxu0 %v360
    %391 = vmatpush.msra.mxu0 %v359
    %392 = vmatmul.f32.gmra.mxu0 %v357
    %v393 = vpop.f32.mrf.mxu0
    %v394 = vadd.f32 %v375, %v393
    %395 = vdwg.mxu0
    %v396 = vsub.f32 0.0, %v394
    %v397 = vmul.f32 %v396, 1.442695
    %v398 = vpow.pop %v397
    %v399 = vadd.f32 %v398, 1.0
    %v400 = vrcp.pop %v399
    %v401 = vmul.f32 %v399, %v400
    %v402 = vsub.f32 1.0, %v401
    %v403 = vmul.f32 %v400, %v402
    %v404 = vadd.f32 %v400, %v403
    %vm405 = vweird.f32 %v399
    %vm406 = vweird.f32 %v400
    %vm407 = vmor %vm405, %vm406
    %v408 = vsel %vm407, %v400, %v404
    %v409 = vand.u32 2147483647, %v399
    %vm410 = vcmp.eq.f32.partialorder %v409, 8.507059e+37
    %v411 = vand.u32 %v399, 2147483648
    %v412 = vor.u32 1.1754944e-38, %v411
    %v413 = vsel %vm410, %v412, %v408
    %v414 = vmul.f32 1.0, %v413
    %s415 = scalar_lea.vmem %s5, 16
    %416 = vst [vmem:[%s415] sm:$0xff] %v414
    %v417 = vld [vmem:[%s1] sm:$0xff]
    %v418 = vld [vmem:[%s1 + $0x8] sm:$0xff]
    %v419 = vadd.f32 %v394, %v417
    %v420 = vadd.f32 %v394, %v418
    %vm421 = vcmp.gt.f32.partialorder %v419, 0.0
    %vm422 = vcmp.gt.f32.partialorder %v420, 0.0
    %v423 = vsel %vm421, 1, 0
    %v424 = vsel %vm422, 1, 0
    %v425 = vcvt.s32.f32 %v423
    %v426 = vcvt.s32.f32 %v424
    %427 = vst [vmem:[%s5] sm:$0xff] %v425
    %428 = vst [vmem:[%s5 + $0x8] sm:$0xff] %v426
    // Predicated region
    $region26: #{vqvae_forward.1} parent=1 // pred_check
      _
    $region27: #{vqvae_forward.1} parent=1 // pred_check_branch
      %430 = sbr.rel (0) target = $region29
    $region28: #{vqvae_forward.1} parent=1 // pred_region
      _
    $region29: #{vqvae_forward.1} parent=1 // pred_fallthru
      _
    // Predicated region
    $region30: #{vqvae_forward.1} parent=1 // pred_check
      _
    $region31: #{vqvae_forward.1} parent=1 // pred_check_branch
      %432 = sbr.rel (0) target = $region33
    $region32: #{vqvae_forward.1} parent=1 // pred_region
      _
    $region33: #{vqvae_forward.1} parent=1 // pred_fallthru
      _
    %433 = vsyncpa [#allocation3], 1

</llo_original>
